<compile_context>
chip_gen: v7x
topology: tpu7x:2x2x1
jax: 0.10.0
libtpu: 0.0.40
codegen_flags: <defaults>
</compile_context>

<pallas_src>
import jax
import jax.numpy as jnp
from jax.experimental import pallas as pl
from jax.experimental.pallas import tpu as pltpu


def _make_pool_kernel(hw_total, hw_tile, needs_mask):
    def pool_kernel(x_ref, sum_ref):
        # x_ref: (C, THW) input tile; sum_ref: (C, 1) f32 accumulator that stays
        # resident in VMEM across the HW-tile (reduction) grid axis.
        t = pl.program_id(1)

        @pl.when(t == 0)
        def _():
            sum_ref[...] = jnp.zeros_like(sum_ref)

        x = x_ref[...].astype(jnp.float32)
        if needs_mask:
            # Ragged final tile: zero out lanes past the true spatial extent.
            lane = jax.lax.broadcasted_iota(jnp.int32, x.shape, 1) + t * hw_tile
            x = jnp.where(lane < hw_total, x, 0.0)
        sum_ref[...] += jnp.sum(x, axis=-1, keepdims=True)

    return pool_kernel


def _scale_kernel(x_ref, attn_ref, o_ref):
    # x_ref / o_ref: (C, THW); attn_ref: (C, 1) f32 per-channel attention.
    # Rescale in the input dtype -- no f32 upcast of the big tile.
    o_ref[...] = x_ref[...] * attn_ref[...].astype(x_ref.dtype)


def _pick_hw_tile(HW, C, dtype_bytes, target_bytes=2 * 1024 * 1024):
    """Lane-dense tile: multiple of 128, ~target_bytes per (C, THW) block.
    ~2 MiB blocks keep double-buffered in+out well under the default scoped
    VMEM on v5e (16 MiB) and v7x (32 MiB of 64 MiB physical)."""
    max_lanes = max(128, (target_bytes // max(1, C * dtype_bytes)) // 128 * 128)
    if HW <= max_lanes:
        return HW          # whole spatial extent in one full-extent tile
    return max_lanes       # multiple of 128; remainder tile handled by masking


def channel_attention(x, w1, w2, hw_tile=None):
    """x: (N, C, H, W). w1: (Cr, C, 1, 1). w2: (C, Cr, 1, 1).
    Matches PyTorch ChannelAttention.forward:
    avg_pool -> conv1x1(no bias) -> relu -> conv1x1(no bias) -> sigmoid -> x*attn."""
    N, C, H, W = x.shape
    Cr = w1.shape[0]
    HW = H * W
    dtype_bytes = jnp.dtype(x.dtype).itemsize

    if hw_tile is None:
        hw_tile = _pick_hw_tile(HW, C, dtype_bytes)
    hw_tile = min(hw_tile, HW)
    n_hw = pl.cdiv(HW, hw_tile)
    needs_mask = (HW % hw_tile) != 0

    x_flat = x.reshape(N, C, HW)

    # ---- pass 1: per-channel spatial sums (Pallas, tiled reduction) ---------
    sums = pl.pallas_call(
        _make_pool_kernel(HW, hw_tile, needs_mask),
        out_shape=jax.ShapeDtypeStruct((N, C, 1), jnp.float32),
        grid_spec=pltpu.PrefetchScalarGridSpec(
            num_scalar_prefetch=0,
            grid=(N, n_hw),
            in_specs=[
                pl.BlockSpec((pl.Squeezed(), C, hw_tile), lambda n, t: (n, 0, t)),
            ],
            out_specs=pl.BlockSpec((pl.Squeezed(), C, 1), lambda n, t: (n, 0, 0)),
        ),
        compiler_params=pltpu.CompilerParams(
            dimension_semantics=("parallel", "arbitrary")),
        cost_estimate=pl.CostEstimate(
            flops=N * C * HW, transcendentals=0,
            bytes_accessed=N * C * HW * dtype_bytes + N * C * 4),
    )(x_flat)

    # ---- tiny squeeze/excite MLP, batched over N (plain JAX) ----------------
    # (N,C)x(C,Cr) and (N,Cr)x(Cr,C) are negligible FLOPs; doing them once here
    # keeps MXU round-trips out of the streaming Pallas loops.
    avg = sums[:, :, 0] * (1.0 / HW)                                  # (N, C) f32
    w1_mat = w1.reshape(Cr, C).T.astype(jnp.float32)                  # (C, Cr)
    w2_mat = w2.reshape(C, Cr).T.astype(jnp.float32)                  # (Cr, C)
    h = jnp.maximum(avg @ w1_mat, 0.0)                                # (N, Cr)
    attn = jax.nn.sigmoid(h @ w2_mat)[:, :, None]                     # (N, C, 1)

    # ---- pass 2: rescale x by the per-channel attention (Pallas) ------------
    out = pl.pallas_call(
        _scale_kernel,
        out_shape=jax.ShapeDtypeStruct((N, C, HW), x.dtype),
        grid_spec=pltpu.PrefetchScalarGridSpec(
            num_scalar_prefetch=0,
            grid=(N, n_hw),
            in_specs=[
                pl.BlockSpec((pl.Squeezed(), C, hw_tile), lambda n, t: (n, 0, t)),
                pl.BlockSpec((pl.Squeezed(), C, 1), lambda n, t: (n, 0, 0)),
            ],
            out_specs=pl.BlockSpec((pl.Squeezed(), C, hw_tile),
                                   lambda n, t: (n, 0, t)),
        ),
        compiler_params=pltpu.CompilerParams(
            dimension_semantics=("parallel", "parallel")),
        cost_estimate=pl.CostEstimate(
            flops=N * C * HW, transcendentals=0,
            bytes_accessed=2 * N * C * HW * dtype_bytes + N * C * 4),
    )(x_flat, attn)

    return out.reshape(N, C, H, W)


def channel_attention_ref(x, w1, w2):
    """Pure-JAX reference mirroring the PyTorch module."""
    N, C, H, W = x.shape
    Cr = w1.shape[0]
    avg = jnp.mean(x.astype(jnp.float32), axis=(2, 3))        # (N, C)
    h = jnp.maximum(avg @ w1.reshape(Cr, C).T, 0.0)           # (N, Cr)
    attn = jax.nn.sigmoid(h @ w2.reshape(C, Cr).T)            # (N, C)
    return x * attn[:, :, None, None].astype(x.dtype)


if __name__ == "__main__":
    key = jax.random.PRNGKey(0)
    kx, k1, k2, kx2 = jax.random.split(key, 4)

    # in_planes must be >= ratio for the PyTorch module to make sense.
    N, C, H, W = 2, 32, 16, 16
    ratio = 16
    Cr = C // ratio

    x = jax.random.normal(kx, (N, C, H, W), dtype=jnp.float32)
    # Deterministic synthetic conv weights (shapes match nn.Conv2d, bias=False).
    w1 = jax.random.normal(k1, (Cr, C, 1, 1), dtype=jnp.float32) * 0.1
    w2 = jax.random.normal(k2, (C, Cr, 1, 1), dtype=jnp.float32) * 0.1

    # Case 1: HW divisible by the lane tile (two lane-dense 128-wide tiles).
    y = jax.block_until_ready(channel_attention(x, w1, w2, hw_tile=128))
    y_ref = channel_attention_ref(x, w1, w2)
    assert y.shape == (N, C, H, W)
    assert jnp.allclose(y, y_ref, atol=1e-5, rtol=1e-5), "mismatch vs reference (case 1)"

    # Case 2: ragged last tile (HW=400, tile=128 -> masked remainder in pooling).
    H2 = W2 = 20
    x2 = jax.random.normal(kx2, (N, C, H2, W2), dtype=jnp.float32)
    y2 = jax.block_until_ready(channel_attention(x2, w1, w2, hw_tile=128))
    y2_ref = channel_attention_ref(x2, w1, w2)
    assert jnp.allclose(y2, y2_ref, atol=1e-5, rtol=1e-5), "mismatch vs reference (case 2)"

    print("KERNEL_OK")
</pallas_src>

<mosaic_0001>
module attributes {stable_mosaic.version = 11 : i64} {
  func.func @pool_kernel(%arg0: i32, %arg1: i32, %arg2: memref<1x32x128xf32, #tpu.memory_space<vmem>>, %arg3: memref<1x32x1xf32, #tpu.memory_space<vmem>>) attributes {dimension_semantics = [#tpu.dimension_semantics<parallel>, #tpu.dimension_semantics<arbitrary>], iteration_bounds = array<i64: 2, 2>, scalar_prefetch = 0 : i64, scratch_operands = 0 : i64, tpu.core_type = #tpu.core_type<tc>, window_params = [{transform_indices = @transform_0, window_bounds = array<i64: 1, 32, 128>}, {transform_indices = @transform_1, window_bounds = array<i64: 1, 32, 1>}]} {
    %c0_i32 = arith.constant 0 : i32
    %0 = arith.cmpi eq, %arg1, %c0_i32 : i32
    %1 = arith.extui %0 : i1 to i32
    %c0_i32_0 = arith.constant 0 : i32
    %2 = arith.cmpi ne, %1, %c0_i32_0 : i32
    scf.if %2 {
      %cst_9 = arith.constant 0.000000e+00 : f32
      %13 = vector.broadcast %cst_9 : f32 to vector<32x1xf32>
      %c0_10 = arith.constant 0 : index
      %c0_11 = arith.constant 0 : index
      %c0_12 = arith.constant 0 : index
      %14 = vector.load %arg3[%c0_10, %c0_11, %c0_12] : memref<1x32x1xf32, #tpu.memory_space<vmem>>, vector<1x32x1xf32>
      %15 = vector.shape_cast %14 : vector<1x32x1xf32> to vector<32x1xf32>
      %16 = vector.shape_cast %13 : vector<32x1xf32> to vector<1x32x1xf32>
      tpu.vector_store %arg3[%c0_10, %c0_11, %c0_12], %16 {strides = array<i32>} : memref<1x32x1xf32, #tpu.memory_space<vmem>>, vector<1x32x1xf32>,
    } else {
    }
    %c0 = arith.constant 0 : index
    %c0_1 = arith.constant 0 : index
    %c0_2 = arith.constant 0 : index
    %3 = vector.load %arg2[%c0, %c0_1, %c0_2] : memref<1x32x128xf32, #tpu.memory_space<vmem>>, vector<1x32x128xf32>
    %4 = vector.shape_cast %3 : vector<1x32x128xf32> to vector<32x128xf32>
    %c0_3 = arith.constant 0 : index
    %c0_4 = arith.constant 0 : index
    %c0_5 = arith.constant 0 : index
    %5 = vector.load %arg3[%c0_3, %c0_4, %c0_5] : memref<1x32x1xf32, #tpu.memory_space<vmem>>, vector<1x32x1xf32>
    %6 = vector.shape_cast %5 : vector<1x32x1xf32> to vector<32x1xf32>
    %cst = arith.constant dense<0.000000e+00> : vector<32xf32>
    %7 = vector.multi_reduction <add>, %4, %cst [1] : vector<32x128xf32> to vector<32xf32>
    %8 = vector.shape_cast %7 : vector<32xf32> to vector<32x1xf32>
    %9 = arith.addf %6, %8 : vector<32x1xf32>
    %c0_6 = arith.constant 0 : index
    %c0_7 = arith.constant 0 : index
    %c0_8 = arith.constant 0 : index
    %10 = vector.load %arg3[%c0_6, %c0_7, %c0_8] : memref<1x32x1xf32, #tpu.memory_space<vmem>>, vector<1x32x1xf32>
    %11 = vector.shape_cast %10 : vector<1x32x1xf32> to vector<32x1xf32>
    %12 = vector.shape_cast %9 : vector<32x1xf32> to vector<1x32x1xf32>
    tpu.vector_store %arg3[%c0_6, %c0_7, %c0_8], %12 {strides = array<i32>} : memref<1x32x1xf32, #tpu.memory_space<vmem>>, vector<1x32x1xf32>,
    return
  }
  func.func @transform_0(%arg0: i32, %arg1: i32) -> (i32, i32, i32) {
    %c0_i32 = arith.constant 0 : i32
    %c0_i32_0 = arith.constant 0 : i32
    return %arg0, %c0_i32, %arg1 : i32, i32, i32
  }
  func.func @transform_1(%arg0: i32, %arg1: i32) -> (i32, i32, i32) {
    %c0_i32 = arith.constant 0 : i32
    %c0_i32_0 = arith.constant 0 : i32
    %c0_i32_1 = arith.constant 0 : i32
    return %arg0, %c0_i32, %c0_i32_0 : i32, i32, i32
  }
}

</mosaic_0001>

<llo_original>
// kernel: tpu_custom_call.1
$region0: #{tpu_custom_call.1}
  #allocation0 [shape = 'u32[]', space=smem, size = 0x4, offset = 0x4, fixed_abs, tag = 'smem constant byte address 0x4 - core index']
  #allocation1 [shape = 'u32[144,128]{1,0:T(1,128)}', space=vmem, size = 0x12000, scoped, tag = 'internal scratch']
  %s0 = inlined_call_operand.hbm [shape: f32[2,32,256], index: 0, kind: input, shape index: {}]
  %s1 = inlined_call_operand.vmem [shape: f32[2,32,1], index: 1, kind: output, shape index: {}]
  %s2 = sld [smem:[#allocation0]]
  $region45: #{tpu_custom_call.1} parent=0
    _
  %s4 = ssub.s32 1, %s2
  %s5 = scalar_select 0, %s4, %s2
  $region1: #{tpu_custom_call.1} parent=0
    #allocation2 [shape = 'u8[32768]{0}', space=vmem, size = 0x8000, scoped, tag = 'input window, operand 0']
    #allocation3 [shape = 's32[2]{0}', space=sflag, size = 0x8, scoped, tag = 'scoped memory for tpu_custom_call.1']
    %6 = vsyncpa [#allocation3], 0
    %s7 = scalar_lea.sflag [#allocation3], 1
    %8 = vsyncpa %s7, 0
    loop: start=0, step=1, limit=6
    $region2: #{tpu_custom_call.1} parent=1 // loop_pre_header
      _
    $region3: #{tpu_custom_call.1} parent=1 // loop_header
      %s10 = sphi 0, %s14
      %p11 = scmp.ge.s32.totalorder %s10, 6
      %s17 = sphi 0, %s29
      %s18 = sphi 0, %s25
      %s19 = sphi 0, %s17
      %s20 = sphi 0, %s18
      %s21 = sphi 0, %s19
      %s22 = sphi 0, %s20
      %s34 = sphi 0, %s36
      %s37 = sphi 0, %s34
      %s38 = sphi 0, %s37
      %s54 = sphi 0, %s38
      %s60 = sphi 0, %s62
      %s63 = sphi 0, %s60
      %s64 = sphi 0, %s63
      %s80 = sphi 0, %s64
    $region4: #{tpu_custom_call.1} parent=1 // loop_header_branch
      %13 = sbr.rel (%p11) target = $region8
    $region5: #{tpu_custom_call.1} parent=1 // loop_body
      %s15 = ssub.s32 %s10, 1
      %s16 = ssub.s32 %s10, 2
      %s23 = sadd.s32 1, %s18
      %p24 = scmp.ge.s32.totalorder %s23, 2
      %s25 = scalar_select %p24, 0, %s23
      %s26 = sadd.s32 1, %s17
      %s27 = scalar_select %p24, %s26, %s17
      %p28 = scmp.ge.s32.totalorder %s27, 2
      %s29 = scalar_select %p28, 0, %s27
      %s30 = ssub.s32 %s17, %s29
      %s31 = ssub.s32 %s18, %s25
      %s32 = sor.u32 %s30, %s31
      %p33 = scmp.eq.s32.totalorder %s32, 0
      %s35 = sadd.s32 %s34, 1
      %s36 = scalar_select %p33, %s34, %s35
      %p39 = pneg %p33
      %p40 = scmp.eq.s32.totalorder %s10, 3
      %p41 = por %p39, %p40
      %p42 = scmp.ne.s32.totalorder %s34, %s37
      %p43 = scmp.eq.s32.totalorder %s10, 0
      %p44 = por %p42, %p43
      %p45 = scmp.ne.s32.totalorder %s34, %s37
      %p46 = scmp.eq.s32.totalorder %s15, 3
      %p47 = por %p45, %p46
      %p48 = scmp.ne.s32.totalorder %s37, %s38
      %p49 = scmp.eq.s32.totalorder %s15, 0
      %p50 = por %p48, %p49
      %p51 = scmp.ne.s32.totalorder %s37, %s38
      %p52 = scmp.eq.s32.totalorder %s16, 3
      %p53 = por %p51, %p52
      %p55 = scmp.ne.s32.totalorder %s38, %s54
      %p56 = scmp.eq.s32.totalorder %s16, 0
      %p57 = por %p55, %p56
      %s58 = ssub.s32 %s17, %s29
      %p59 = scmp.eq.s32.totalorder %s58, 0
      %s61 = sadd.s32 %s60, 1
      %s62 = scalar_select %p59, %s60, %s61
      %p65 = pneg %p59
      %p66 = scmp.eq.s32.totalorder %s10, 3
      %p67 = por %p65, %p66
      %p68 = scmp.ne.s32.totalorder %s60, %s63
      %p69 = scmp.eq.s32.totalorder %s10, 0
      %p70 = por %p68, %p69
      %p71 = scmp.ne.s32.totalorder %s60, %s63
      %p72 = scmp.eq.s32.totalorder %s15, 3
      %p73 = por %p71, %p72
      %p74 = scmp.ne.s32.totalorder %s63, %s64
      %p75 = scmp.eq.s32.totalorder %s15, 0
      %p76 = por %p74, %p75
      %p77 = scmp.ne.s32.totalorder %s63, %s64
      %p78 = scmp.eq.s32.totalorder %s16, 3
      %p79 = por %p77, %p78
      %p81 = scmp.ne.s32.totalorder %s64, %s80
      %p82 = scmp.eq.s32.totalorder %s16, 0
      %p83 = por %p81, %p82
      %p84 = scmp.le.s32.totalorder 1, %s10
      %p85 = scmp.lt.s32.totalorder %s10, 5
      %p86 = pnand %p84, %p85
      %p87 = pneg %p86
      // Predicated region
      $region9: #{tpu_custom_call.1} parent=5 // pred_check
        _
      $region10: #{tpu_custom_call.1} parent=5 // pred_check_branch
        %89 = sbr.rel (%p86) target = $region12
      $region11: #{tpu_custom_call.1} parent=5 // pred_region
        %s90 = ssub.s32 %s10, 1
      $region12: #{tpu_custom_call.1} parent=5 // pred_fallthru
        _
      %p91 = scmp.lt.s32.totalorder %s10, 4
      // Predicated region
      $region13: #{tpu_custom_call.1} parent=5 // pred_check
        %p92 = pneg %p91
      $region14: #{tpu_custom_call.1} parent=5 // pred_check_branch
        %94 = sbr.rel (%p92) target = $region16
      $region15: #{tpu_custom_call.1} parent=5 // pred_region
        // Predicated region
        $region17: #{tpu_custom_call.1} parent=15 // pred_check
          %p95 = pneg %p44
        $region18: #{tpu_custom_call.1} parent=15 // pred_check_branch
          %97 = sbr.rel (%p95) target = $region20
        $region19: #{tpu_custom_call.1} parent=15 // pred_region
          %s98 = sand.u32 %s34, 1
          %s99 = scalar_lea.sflag [#allocation3], %s98
          %s100 = sand.u32 %s34, 1
          %s101 = smul.addr %s100, 32
          %s102 = scalar_lea.vmem [#allocation2], %s101
          %s104 = ssub.s32 512, 512
          %105 = vsyncadd %s99, %s104
          %s106 = smul.addr %s17, 8
          %s107 = sadd.s32 %s18, %s106
          %s108 = smul.addr %s107, 128
          %s109 = scalar_lea.hbm %s0, %s108
          %s110 = sshll.u32 %s102, 4
          %s111 = int_to_ptr.vmem [resolvable:$true] %s110
          %116 = dma.hbm_to_vmem [thread:$0]  %s109, 512, %s111, %s99, 256, 128, 8
        $region20: #{tpu_custom_call.1} parent=15 // pred_fallthru
          _
      $region16: #{tpu_custom_call.1} parent=5 // pred_fallthru
        _
      %p117 = scmp.le.s32.totalorder 1, %s10
      %p118 = scmp.lt.s32.totalorder %s10, 5
      %p119 = pnand %p117, %p118
      %p120 = pneg %p119
      // Predicated region
      $region21: #{tpu_custom_call.1} parent=5 // pred_check
        _
      $region22: #{tpu_custom_call.1} parent=5 // pred_check_branch
        %122 = sbr.rel (%p119) target = $region24
      $region23: #{tpu_custom_call.1} parent=5 // pred_region
        %s123 = ssub.s32 %s10, 1
        %s124 = sand.u32 %s37, 1
        %s125 = scalar_lea.sflag [#allocation3], %s124
        %s126 = sand.u32 %s37, 1
        %s127 = smul.addr %s126, 32
        %s128 = scalar_lea.vmem [#allocation2], %s127
        // Predicated region
        $region25: #{tpu_custom_call.1} parent=23 // pred_check
          %p129 = pneg %p50
        $region26: #{tpu_custom_call.1} parent=23 // pred_check_branch
          %131 = sbr.rel (%p129) target = $region28
        $region27: #{tpu_custom_call.1} parent=23 // pred_region
          %132 = dma.done %s125, 512
        $region28: #{tpu_custom_call.1} parent=23 // pred_fallthru
          _
        %s133 = sand.u32 %s37, 1
        %s134 = scalar_lea.sflag [#allocation3], %s133
        %s135 = sand.u32 %s37, 1
        %s136 = smul.addr %s135, 32
        %s137 = scalar_lea.vmem [#allocation2], %s136
        %p138 = pneg %p50
        %p139 = pneg %p47
        %p140 = pneg %p76
        %p141 = pneg %p73
        %p142 = scmp.lt.s32.totalorder %s19, 1
        %s143 = scalar_select %p142, %s19, 1
        %s144 = smul.addr %s143, 4
        %s145 = smul.addr %s144, 8
        %s146 = scalar_lea.vmem %s1, %s145
        %p147 = scmp.lt.s32.totalorder %s19, 1
        %s148 = scalar_select %p147, %s19, 1
        %s149 = smul.addr %s148, 4
        %s150 = smul.addr %s149, 8
        %s151 = scalar_lea.vmem %s1, %s150
        %p152 = scmp.eq.s32.totalorder %s20, 0
        // Predicated region
        $region29: #{tpu_custom_call.1} parent=23 // pred_check
          %p153 = pneg %p152
        $region30: #{tpu_custom_call.1} parent=23 // pred_check_branch
          %155 = sbr.rel (%p153) target = $region32
        $region31: #{tpu_custom_call.1} parent=23 // pred_region
          %vm156 = vcmask 7168
          %157 = vst.msk [vmem:[%s151] sm:$0xff] %vm156, 0.0
          %158 = vst.msk [vmem:[%s151 + $0x8] sm:$0xff] %vm156, 0.0
          %159 = vst.msk [vmem:[%s151 + $0x10] sm:$0xff] %vm156, 0.0
          %160 = vst.msk [vmem:[%s151 + $0x18] sm:$0xff] %vm156, 0.0
        $region32: #{tpu_custom_call.1} parent=23 // pred_fallthru
          _
        %v161 = vld [vmem:[%s128] sm:$0xff]
        %v162 = vld [vmem:[%s128 + $0x8] sm:$0xff]
        %v163 = vld [vmem:[%s128 + $0x10] sm:$0xff]
        %v164 = vld [vmem:[%s128 + $0x18] sm:$0xff]
        %v165 = vld [vmem:[%s151] sm:$0xff]
        %v166 = vld [vmem:[%s151 + $0x8] sm:$0xff]
        %v167 = vld [vmem:[%s151 + $0x10] sm:$0xff]
        %v168 = vld [vmem:[%s151 + $0x18] sm:$0xff]
        %169 = vadd.xlane.f32.xlu0 %v161
        %v170 = vpop.xlane.xlu0 %169
        %171 = vadd.xlane.f32.xlu0 %v162
        %v172 = vpop.xlane.xlu0 %171
        %173 = vadd.xlane.f32.xlu0 %v163
        %v174 = vpop.xlane.xlu0 %173
        %175 = vadd.xlane.f32.xlu0 %v164
        %v176 = vpop.xlane.xlu0 %175
        %v177 = vadd.f32 %v165, %v170
        %v178 = vadd.f32 %v166, %v172
        %v179 = vadd.f32 %v167, %v174
        %v180 = vadd.f32 %v168, %v176
        %vm181 = vcmask 7168
        %182 = vst.msk [vmem:[%s151] sm:$0xff] %vm181, %v177
        %183 = vst.msk [vmem:[%s151 + $0x8] sm:$0xff] %vm181, %v178
        %184 = vst.msk [vmem:[%s151 + $0x10] sm:$0xff] %vm181, %v179
        %185 = vst.msk [vmem:[%s151 + $0x18] sm:$0xff] %vm181, %v180
        %p186 = scmp.lt.s32.totalorder %s19, 1
        %s187 = scalar_select %p186, %s19, 1
        %s188 = smul.addr %s187, 4
        %s189 = smul.addr %s188, 8
        %s190 = scalar_lea.vmem %s1, %s189
        // Predicated region
        $region33: #{tpu_custom_call.1} parent=23 // pred_check
          %p191 = pneg %p73
        $region34: #{tpu_custom_call.1} parent=23 // pred_check_branch
          %193 = sbr.rel (%p191) target = $region36
        $region35: #{tpu_custom_call.1} parent=23 // pred_region
          _
        $region36: #{tpu_custom_call.1} parent=23 // pred_fallthru
          _
      $region24: #{tpu_custom_call.1} parent=5 // pred_fallthru
        _
      %p194 = scmp.le.s32.totalorder 2, %s10
      // Predicated region
      $region37: #{tpu_custom_call.1} parent=5 // pred_check
        %p195 = pneg %p194
      $region38: #{tpu_custom_call.1} parent=5 // pred_check_branch
        %197 = sbr.rel (%p195) target = $region40
      $region39: #{tpu_custom_call.1} parent=5 // pred_region
        %s198 = ssub.s32 %s10, 2
        // Predicated region
        $region41: #{tpu_custom_call.1} parent=39 // pred_check
          %p199 = pneg %p79
        $region42: #{tpu_custom_call.1} parent=39 // pred_check_branch
          %201 = sbr.rel (%p199) target = $region44
        $region43: #{tpu_custom_call.1} parent=39 // pred_region
          %p202 = scmp.lt.s32.totalorder %s21, 1
          %s203 = scalar_select %p202, %s21, 1
          %s204 = smul.addr %s203, 4
          %s205 = smul.addr %s204, 8
          %s206 = scalar_lea.vmem %s1, %s205
        $region44: #{tpu_custom_call.1} parent=39 // pred_fallthru
          _
      $region40: #{tpu_custom_call.1} parent=5 // pred_fallthru
        _
    $region6: #{tpu_custom_call.1} parent=1 // loop_footer
      %s14 = sadd.s32 1, %s10
    $region7: #{tpu_custom_call.1} parent=1 // loop_footer_branch
      %9 = sbr.rel target = $region3
    $region8: #{tpu_custom_call.1} parent=1 // loop_exit
      _
    %207 = vsyncpa [#allocation3], 1
    %s208 = scalar_lea.sflag [#allocation3], 1
    %209 = vsyncpa %s208, 1

</llo_original>
